<compile_context>
chip_gen: v7x
topology: tpu7x:2x2x1
jax: 0.10.0
libtpu: 0.0.40
codegen_flags: <defaults>
</compile_context>

<pallas_src>
import jax
import jax.numpy as jnp
from jax.experimental import pallas as pl
from jax.experimental.pallas import tpu as pltpu


def _softplus(x):
    # matches torch.nn.Softplus(beta=1, threshold=20)
    return jnp.where(x > 20.0, x, jnp.log1p(jnp.exp(jnp.minimum(x, 20.0))))


def vae_kernel(x_ref, eps_ref, w_ref, b_ref, out_ref):
    """
    x_ref:   (B, C_in)      f32    input rows (cast to bf16 in-kernel)
    eps_ref: (S*B, L)       f32    reparameterization noise, sample-major rows (s*B + b)
    w_ref:   (6, 32, 32)    bf16   stacked [w1, w2, wm|wv, wd1_pad, wd2, wd3]
    b_ref:   (6, 32)        f32    stacked [b1, b2, bm|bv, bd1, bd2, bd3]
    out_ref: (S*B, C_in)    f32    reconstruction (wrapper reshapes to (S, B, C_in))
    """
    f32, bf16 = jnp.float32, jnp.bfloat16

    x = x_ref[...].astype(bf16)            # (B, C_in) bf16 (cast here, not in the wrapper)
    eps = eps_ref[...]                     # (S*B, L)  f32
    b = b_ref[...]                         # (6, 32)   f32
    w1, w2, wmv, wd1p, wd2, wd3 = (w_ref[i] for i in range(6))   # each (32, 32) bf16

    L = eps_ref.shape[1]
    B = x_ref.shape[0]
    S = eps_ref.shape[0] // B              # static

    # ---------------- Encoder (Linear+ReLU, Linear+ReLU) ----------------
    h = jnp.dot(x, w1, preferred_element_type=f32) + b[0:1, :]
    h = jnp.maximum(h, 0.0)
    h = jnp.dot(h.astype(bf16), w2, preferred_element_type=f32) + b[1:2, :]
    h = jnp.maximum(h, 0.0)

    # Fused mean/var heads: ONE (H, 2L) matmul, then static lane slices.
    mv = jnp.dot(h.astype(bf16), wmv, preferred_element_type=f32) + b[2:3, :]   # (B, 2L)
    mean = mv[:, :L]                       # (B, L)
    std = jnp.sqrt(_softplus(mv[:, L:]))   # (B, L)  Softplus >= 0, sqrt safe; all f32

    # ---------------- LatentSampler: z = mean + sqrt(var) * eps ----------------
    # Sample-major sublane concat broadcast (no 3-D reshape / broadcast in the kernel).
    mean_rep = jnp.concatenate([mean] * S, axis=0)   # (S*B, L)
    std_rep = jnp.concatenate([std] * S, axis=0)     # (S*B, L)
    z = mean_rep + std_rep * eps                     # (S*B, L) f32

    # ---------------- Decoder (Linear+ReLU, Linear+ReLU, Linear+Sigmoid) --------
    wd1 = wd1p[:L, :]                                # valid rows of the zero-padded slice
    d = jnp.dot(z.astype(bf16), wd1, preferred_element_type=f32) + b[3:4, :]
    d = jnp.maximum(d, 0.0)
    d = jnp.dot(d.astype(bf16), wd2, preferred_element_type=f32) + b[4:5, :]
    d = jnp.maximum(d, 0.0)
    logits = jnp.dot(d.astype(bf16), wd3, preferred_element_type=f32) + b[5:6, :]
    # sigmoid(x) = 0.5 * (tanh(x/2) + 1): one EUP transcendental, exact (no approx recip)
    recon = 0.5 * (jnp.tanh(0.5 * logits) + 1.0)

    out_ref[...] = recon.astype(out_ref.dtype)       # (S*B, C_in)


@jax.jit
def vae_forward(x, eps, w_stack, b_stack):
    """x: (B, C_in) f32, eps: (S, B, L) f32 sample-major, returns (S, B, C_in) f32.

    eps is i.i.d. noise, so generating it sample-major is free; both the input reshape and
    the output reshape below are copy-free (no transposes around the pallas_call).
    """
    B, c_in = x.shape
    S, _, L = eps.shape

    eps_flat = eps.reshape(S * B, L)       # pure reshape, row s*B + b

    vmem = pl.BlockSpec(memory_space=pltpu.MemorySpace.VMEM)
    out2d = pl.pallas_call(
        vae_kernel,
        out_shape=jax.ShapeDtypeStruct((S * B, c_in), jnp.float32),
        in_specs=[vmem] * 4,
        out_specs=vmem,
    )(x, eps_flat, w_stack, b_stack)

    # rows are (s, b) ordered -> (S, B, C_in) slab; consumers needing (B, S, C_in) can
    # fuse the transpose downstream.
    return out2d.reshape(S, B, c_in)


def init_params(key, in_channels, hidden_channels, latent_dim):
    """Raw f32 params. Weights stored as (in_features, out_features)."""
    keys = jax.random.split(key, 16)

    def lin(kw, kb, fan_in, fan_out):
        scale = 1.0 / jnp.sqrt(jnp.float32(fan_in))
        w = jax.random.uniform(kw, (fan_in, fan_out), jnp.float32, -scale, scale)
        b = jax.random.uniform(kb, (fan_out,), jnp.float32, -scale, scale)
        return w, b

    p = {}
    p["w1"], p["b1"] = lin(keys[0], keys[1], in_channels, hidden_channels)
    p["w2"], p["b2"] = lin(keys[2], keys[3], hidden_channels, hidden_channels)
    p["wm"], p["bm"] = lin(keys[4], keys[5], hidden_channels, latent_dim)
    p["wv"], p["bv"] = lin(keys[6], keys[7], hidden_channels, latent_dim)
    p["wd1"], p["bd1"] = lin(keys[8], keys[9], latent_dim, hidden_channels)
    p["wd2"], p["bd2"] = lin(keys[10], keys[11], hidden_channels, hidden_channels)
    p["wd3"], p["bd3"] = lin(keys[12], keys[13], hidden_channels, in_channels)
    return p


def pack_params(p):
    """Pack 16 tensors into 2 kernel operands (weights bf16, biases f32)."""
    H = p["w1"].shape[1]
    L = p["wd1"].shape[0]
    wmv = jnp.concatenate([p["wm"], p["wv"]], axis=1)        # (H, 2L) fused head
    bmv = jnp.concatenate([p["bm"], p["bv"]], axis=0)        # (2L,)
    wd1_pad = jnp.pad(p["wd1"], ((0, H - L), (0, 0)))        # (H, H), rows L.. are zero
    ws = [p["w1"], p["w2"], wmv, wd1_pad, p["wd2"], p["wd3"]]
    bs = [p["b1"], p["b2"], bmv, p["bd1"], p["bd2"], p["bd3"]]
    # Load-bearing: packing assumes equal widths (C_in == hidden == 2*latent here); the
    # fused mean|var lane slicing silently breaks otherwise.
    assert len({w.shape for w in ws}) == 1 and len({b.shape for b in bs}) == 1
    w_stack = jnp.stack(ws).astype(jnp.bfloat16)             # (6, 32, 32)
    b_stack = jnp.stack(bs).astype(jnp.float32)              # (6, 32)
    return w_stack, b_stack


def vae_reference(x, eps, p):
    """Pure-JAX reference mirroring the kernel's bf16-matmul / f32-elementwise numerics.

    eps is sample-major (S, B, L); output is (S, B, C_in) to match the kernel layout.
    """
    bf16, f32 = jnp.bfloat16, jnp.float32

    def dot(a, w):
        return jnp.dot(a.astype(bf16), w.astype(bf16), preferred_element_type=f32)

    h = jnp.maximum(dot(x, p["w1"]) + p["b1"], 0.0)
    h = jnp.maximum(dot(h, p["w2"]) + p["b2"], 0.0)
    mean = dot(h, p["wm"]) + p["bm"]
    var = jax.nn.softplus(dot(h, p["wv"]) + p["bv"])
    # LatentSampler: z = mean + sqrt(var) * eps
    z = mean[None, :, :] + jnp.sqrt(var)[None, :, :] * eps   # (S, B, L)
    S, B, L = eps.shape
    zf = z.reshape(S * B, L)
    d = jnp.maximum(dot(zf, p["wd1"]) + p["bd1"], 0.0)
    d = jnp.maximum(dot(d, p["wd2"]) + p["bd2"], 0.0)
    out = jax.nn.sigmoid(dot(d, p["wd3"]) + p["bd3"])
    return out.reshape(S, B, -1)


if __name__ == "__main__":
    # Small shapes consistent with the module's forward: input rows are (batch, in_channels).
    B, C_IN, HIDDEN, LATENT, N_SAMPLES = 8, 32, 32, 16, 2

    key = jax.random.PRNGKey(0)
    k_param, k_x, k_eps = jax.random.split(key, 3)

    params = init_params(k_param, C_IN, HIDDEN, LATENT)
    w_stack, b_stack = pack_params(params)
    x = jax.random.normal(k_x, (B, C_IN), jnp.float32)
    # TODO(synk): torch.randn inside LatentSampler cannot be bit-matched; the noise is
    # generated deterministically here, already sample-major so the kernel needs no transpose.
    eps = jax.random.normal(k_eps, (N_SAMPLES, B, LATENT), jnp.float32)

    out = vae_forward(x, eps, w_stack, b_stack)
    out = jax.block_until_ready(out)

    ref = vae_reference(x, eps, params)
    assert out.shape == (N_SAMPLES, B, C_IN)
    # Tight tolerance: tanh-based sigmoid is exact, so the only divergence left is the
    # bf16 matmul inputs / f32 accumulation, which the reference mirrors.
    assert jnp.allclose(out, ref, atol=1e-3, rtol=1e-3), float(jnp.max(jnp.abs(out - ref)))

    print("KERNEL_OK")
</pallas_src>

<mosaic_0001>
module attributes {stable_mosaic.version = 11 : i64} {
  func.func @vae_kernel(%arg0: memref<8x32xf32, #tpu.memory_space<vmem>>, %arg1: memref<16x16xf32, #tpu.memory_space<vmem>>, %arg2: memref<6x32x32xbf16, #tpu.memory_space<vmem>>, %arg3: memref<6x32xf32, #tpu.memory_space<vmem>>, %arg4: memref<16x32xf32, #tpu.memory_space<vmem>>) attributes {dimension_semantics = [], scalar_prefetch = 0 : i64, scratch_operands = 0 : i64, tpu.core_type = #tpu.core_type<tc>} {
    %c0 = arith.constant 0 : index
    %c0_0 = arith.constant 0 : index
    %0 = vector.load %arg0[%c0, %c0_0] : memref<8x32xf32, #tpu.memory_space<vmem>>, vector<8x32xf32>
    %1 = arith.truncf %0 : vector<8x32xf32> to vector<8x32xbf16>
    %c0_1 = arith.constant 0 : index
    %c0_2 = arith.constant 0 : index
    %2 = vector.load %arg1[%c0_1, %c0_2] : memref<16x16xf32, #tpu.memory_space<vmem>>, vector<16x16xf32>
    %c0_3 = arith.constant 0 : index
    %c0_4 = arith.constant 0 : index
    %3 = vector.load %arg3[%c0_3, %c0_4] : memref<6x32xf32, #tpu.memory_space<vmem>>, vector<6x32xf32>
    %c0_5 = arith.constant 0 : index
    %c0_6 = arith.constant 0 : index
    %c0_7 = arith.constant 0 : index
    %4 = vector.load %arg2[%c0_5, %c0_6, %c0_7] : memref<6x32x32xbf16, #tpu.memory_space<vmem>>, vector<1x32x32xbf16>
    %5 = vector.shape_cast %4 : vector<1x32x32xbf16> to vector<32x32xbf16>
    %c1 = arith.constant 1 : index
    %c0_8 = arith.constant 0 : index
    %c0_9 = arith.constant 0 : index
    %6 = vector.load %arg2[%c1, %c0_8, %c0_9] : memref<6x32x32xbf16, #tpu.memory_space<vmem>>, vector<1x32x32xbf16>
    %7 = vector.shape_cast %6 : vector<1x32x32xbf16> to vector<32x32xbf16>
    %c2 = arith.constant 2 : index
    %c0_10 = arith.constant 0 : index
    %c0_11 = arith.constant 0 : index
    %8 = vector.load %arg2[%c2, %c0_10, %c0_11] : memref<6x32x32xbf16, #tpu.memory_space<vmem>>, vector<1x32x32xbf16>
    %9 = vector.shape_cast %8 : vector<1x32x32xbf16> to vector<32x32xbf16>
    %c3 = arith.constant 3 : index
    %c0_12 = arith.constant 0 : index
    %c0_13 = arith.constant 0 : index
    %10 = vector.load %arg2[%c3, %c0_12, %c0_13] : memref<6x32x32xbf16, #tpu.memory_space<vmem>>, vector<1x32x32xbf16>
    %11 = vector.shape_cast %10 : vector<1x32x32xbf16> to vector<32x32xbf16>
    %c4 = arith.constant 4 : index
    %c0_14 = arith.constant 0 : index
    %c0_15 = arith.constant 0 : index
    %12 = vector.load %arg2[%c4, %c0_14, %c0_15] : memref<6x32x32xbf16, #tpu.memory_space<vmem>>, vector<1x32x32xbf16>
    %13 = vector.shape_cast %12 : vector<1x32x32xbf16> to vector<32x32xbf16>
    %c5 = arith.constant 5 : index
    %c0_16 = arith.constant 0 : index
    %c0_17 = arith.constant 0 : index
    %14 = vector.load %arg2[%c5, %c0_16, %c0_17] : memref<6x32x32xbf16, #tpu.memory_space<vmem>>, vector<1x32x32xbf16>
    %15 = vector.shape_cast %14 : vector<1x32x32xbf16> to vector<32x32xbf16>
    %cst = arith.constant dense<0.000000e+00> : vector<8x32xf32>
    %16 = tpu.matmul %1, %5, %cst {dimension_numbers = #tpu.dot_dimension_numbers<[1], [0], [0], [1], [0, 0, 1, 1], [], []>} : vector<8x32xbf16>, vector<32x32xbf16>, vector<8x32xf32> -> vector<8x32xf32>
    %17 = vector.extract_strided_slice %3 {offsets = [0, 0], sizes = [1, 32], strides = [1, 1]} : vector<6x32xf32> to vector<1x32xf32>
    %18 = vector.broadcast %17 : vector<1x32xf32> to vector<8x32xf32>
    %19 = arith.addf %16, %18 : vector<8x32xf32>
    %cst_18 = arith.constant 0.000000e+00 : f32
    %20 = vector.broadcast %cst_18 : f32 to vector<8x32xf32>
    %21 = arith.maximumf %19, %20 : vector<8x32xf32>
    %22 = arith.truncf %21 : vector<8x32xf32> to vector<8x32xbf16>
    %cst_19 = arith.constant dense<0.000000e+00> : vector<8x32xf32>
    %23 = tpu.matmul %22, %7, %cst_19 {dimension_numbers = #tpu.dot_dimension_numbers<[1], [0], [0], [1], [0, 0, 1, 1], [], []>} : vector<8x32xbf16>, vector<32x32xbf16>, vector<8x32xf32> -> vector<8x32xf32>
    %24 = vector.extract_strided_slice %3 {offsets = [1, 0], sizes = [1, 32], strides = [1, 1]} : vector<6x32xf32> to vector<1x32xf32>
    %25 = vector.broadcast %24 : vector<1x32xf32> to vector<8x32xf32>
    %26 = arith.addf %23, %25 : vector<8x32xf32>
    %cst_20 = arith.constant 0.000000e+00 : f32
    %27 = vector.broadcast %cst_20 : f32 to vector<8x32xf32>
    %28 = arith.maximumf %26, %27 : vector<8x32xf32>
    %29 = arith.truncf %28 : vector<8x32xf32> to vector<8x32xbf16>
    %cst_21 = arith.constant dense<0.000000e+00> : vector<8x32xf32>
    %30 = tpu.matmul %29, %9, %cst_21 {dimension_numbers = #tpu.dot_dimension_numbers<[1], [0], [0], [1], [0, 0, 1, 1], [], []>} : vector<8x32xbf16>, vector<32x32xbf16>, vector<8x32xf32> -> vector<8x32xf32>
    %31 = vector.extract_strided_slice %3 {offsets = [2, 0], sizes = [1, 32], strides = [1, 1]} : vector<6x32xf32> to vector<1x32xf32>
    %32 = vector.broadcast %31 : vector<1x32xf32> to vector<8x32xf32>
    %33 = arith.addf %30, %32 : vector<8x32xf32>
    %34 = vector.extract_strided_slice %33 {offsets = [0, 0], sizes = [8, 16], strides = [1, 1]} : vector<8x32xf32> to vector<8x16xf32>
    %35 = vector.extract_strided_slice %33 {offsets = [0, 16], sizes = [8, 16], strides = [1, 1]} : vector<8x32xf32> to vector<8x16xf32>
    %cst_22 = arith.constant 2.000000e+01 : f32
    %36 = vector.broadcast %cst_22 : f32 to vector<8x16xf32>
    %37 = arith.cmpf ogt, %35, %36 : vector<8x16xf32>
    %cst_23 = arith.constant 2.000000e+01 : f32
    %38 = vector.broadcast %cst_23 : f32 to vector<8x16xf32>
    %39 = arith.minimumf %35, %38 : vector<8x16xf32>
    %40 = math.exp %39 : vector<8x16xf32>
    %41 = math.log1p %40 : vector<8x16xf32>
    %42 = arith.select %37, %35, %41 : vector<8x16xi1>, vector<8x16xf32>
    %43 = math.sqrt %42 : vector<8x16xf32>
    %44 = tpu.concatenate %34, %34 in 0 : vector<8x16xf32>, vector<8x16xf32> -> vector<16x16xf32>
    %45 = tpu.concatenate %43, %43 in 0 : vector<8x16xf32>, vector<8x16xf32> -> vector<16x16xf32>
    %46 = arith.mulf %45, %2 : vector<16x16xf32>
    %47 = arith.addf %44, %46 : vector<16x16xf32>
    %48 = vector.extract_strided_slice %11 {offsets = [0, 0], sizes = [16, 32], strides = [1, 1]} : vector<32x32xbf16> to vector<16x32xbf16>
    %49 = arith.truncf %47 : vector<16x16xf32> to vector<16x16xbf16>
    %cst_24 = arith.constant dense<0.000000e+00> : vector<16x32xf32>
    %50 = tpu.matmul %49, %48, %cst_24 {dimension_numbers = #tpu.dot_dimension_numbers<[1], [0], [0], [1], [0, 0, 1, 1], [], []>} : vector<16x16xbf16>, vector<16x32xbf16>, vector<16x32xf32> -> vector<16x32xf32>
    %51 = vector.extract_strided_slice %3 {offsets = [3, 0], sizes = [1, 32], strides = [1, 1]} : vector<6x32xf32> to vector<1x32xf32>
    %52 = vector.broadcast %51 : vector<1x32xf32> to vector<16x32xf32>
    %53 = arith.addf %50, %52 : vector<16x32xf32>
    %cst_25 = arith.constant 0.000000e+00 : f32
    %54 = vector.broadcast %cst_25 : f32 to vector<16x32xf32>
    %55 = arith.maximumf %53, %54 : vector<16x32xf32>
    %56 = arith.truncf %55 : vector<16x32xf32> to vector<16x32xbf16>
    %cst_26 = arith.constant dense<0.000000e+00> : vector<16x32xf32>
    %57 = tpu.matmul %56, %13, %cst_26 {dimension_numbers = #tpu.dot_dimension_numbers<[1], [0], [0], [1], [0, 0, 1, 1], [], []>} : vector<16x32xbf16>, vector<32x32xbf16>, vector<16x32xf32> -> vector<16x32xf32>
    %58 = vector.extract_strided_slice %3 {offsets = [4, 0], sizes = [1, 32], strides = [1, 1]} : vector<6x32xf32> to vector<1x32xf32>
    %59 = vector.broadcast %58 : vector<1x32xf32> to vector<16x32xf32>
    %60 = arith.addf %57, %59 : vector<16x32xf32>
    %cst_27 = arith.constant 0.000000e+00 : f32
    %61 = vector.broadcast %cst_27 : f32 to vector<16x32xf32>
    %62 = arith.maximumf %60, %61 : vector<16x32xf32>
    %63 = arith.truncf %62 : vector<16x32xf32> to vector<16x32xbf16>
    %cst_28 = arith.constant dense<0.000000e+00> : vector<16x32xf32>
    %64 = tpu.matmul %63, %15, %cst_28 {dimension_numbers = #tpu.dot_dimension_numbers<[1], [0], [0], [1], [0, 0, 1, 1], [], []>} : vector<16x32xbf16>, vector<32x32xbf16>, vector<16x32xf32> -> vector<16x32xf32>
    %65 = vector.extract_strided_slice %3 {offsets = [5, 0], sizes = [1, 32], strides = [1, 1]} : vector<6x32xf32> to vector<1x32xf32>
    %66 = vector.broadcast %65 : vector<1x32xf32> to vector<16x32xf32>
    %67 = arith.addf %64, %66 : vector<16x32xf32>
    %cst_29 = arith.constant 5.000000e-01 : f32
    %68 = vector.broadcast %cst_29 : f32 to vector<16x32xf32>
    %69 = arith.mulf %68, %67 : vector<16x32xf32>
    %70 = math.tanh %69 : vector<16x32xf32>
    %cst_30 = arith.constant 1.000000e+00 : f32
    %71 = vector.broadcast %cst_30 : f32 to vector<16x32xf32>
    %72 = arith.addf %70, %71 : vector<16x32xf32>
    %cst_31 = arith.constant 5.000000e-01 : f32
    %73 = vector.broadcast %cst_31 : f32 to vector<16x32xf32>
    %74 = arith.mulf %73, %72 : vector<16x32xf32>
    %c0_32 = arith.constant 0 : index
    %c0_33 = arith.constant 0 : index
    %75 = vector.load %arg4[%c0_32, %c0_33] : memref<16x32xf32, #tpu.memory_space<vmem>>, vector<16x32xf32>
    tpu.vector_store %arg4[%c0_32, %c0_33], %74 {strides = array<i32>} : memref<16x32xf32, #tpu.memory_space<vmem>>, vector<16x32xf32>,
    return
  }
}

</mosaic_0001>

<llo_original>
// kernel: vae_forward.1
$region0: #{vae_forward.1}
  #allocation0 [shape = 'u32[]', space=smem, size = 0x4, offset = 0x4, fixed_abs, tag = 'smem constant byte address 0x4 - core index']
  #allocation1 [shape = 'u32[144,128]{1,0:T(1,128)}', space=vmem, size = 0x12000, scoped, tag = 'internal scratch']
  %s0 = inlined_call_operand.hbm [shape: f32[8,32], index: 0, kind: input, shape index: {}]
  %s1 = inlined_call_operand.hbm [shape: f32[16,16], index: 1, kind: input, shape index: {}]
  %s2 = inlined_call_operand.hbm [shape: bf16[6,32,32], index: 2, kind: input, shape index: {}]
  %s3 = inlined_call_operand.vmem [shape: f32[6,32], index: 3, kind: input, shape index: {}]
  %s4 = inlined_call_operand.hbm [shape: f32[16,32], index: 4, kind: output, shape index: {}]
  %s5 = sld [smem:[#allocation0]]
  $region38: #{vae_forward.1} parent=0
    _
  %s7 = ssub.s32 1, %s5
  %s8 = scalar_select 0, %s7, %s5
  $region1: #{vae_forward.1} parent=0
    #allocation2 [shape = 'u8[4096]{0}', space=vmem, size = 0x1000, scoped, tag = 'input window, operand 0, single buffered']
    #allocation3 [shape = 's32[1]{0}', space=sflag, size = 0x4, scoped, tag = 'scoped memory for vae_forward.1']
    #allocation4 [shape = 's32[1]{0}', space=sflag, size = 0x4, scoped, tag = 'scoped memory for vae_forward.1']
    #allocation5 [shape = 'u8[8192]{0}', space=vmem, size = 0x2000, scoped, tag = 'input window, operand 1, single buffered']
    #allocation6 [shape = 's32[1]{0}', space=sflag, size = 0x4, scoped, tag = 'scoped memory for vae_forward.1']
    #allocation7 [shape = 'u8[49152]{0}', space=vmem, size = 0xc000, scoped, tag = 'input window, operand 2, single buffered']
    #allocation8 [shape = 'u8[8192]{0}', space=vmem, size = 0x2000, scoped, tag = 'output window, operand 0, single buffered']
    %9 = vsyncpa [#allocation3], 0
    %10 = vsyncpa [#allocation6], 0
    %11 = vsyncpa [#allocation4], 0
    // Predicated region
    $region2: #{vae_forward.1} parent=1 // pred_check
      _
    $region3: #{vae_forward.1} parent=1 // pred_check_branch
      %13 = sbr.rel (0) target = $region5
    $region4: #{vae_forward.1} parent=1 // pred_region
      %s15 = ssub.s32 128, 128
      %16 = vsyncadd [#allocation3], %s15
      %s18 = sshll.u32 [#allocation2], 4
      %s19 = int_to_ptr.vmem [resolvable:$true] %s18
      %21 = dma.hbm_to_vmem [thread:$0]  %s0, 128, %s19, [#allocation3]
    $region5: #{vae_forward.1} parent=1 // pred_fallthru
      _
    // Predicated region
    $region6: #{vae_forward.1} parent=1 // pred_check
      _
    $region7: #{vae_forward.1} parent=1 // pred_check_branch
      %23 = sbr.rel (0) target = $region9
    $region8: #{vae_forward.1} parent=1 // pred_region
      %s25 = ssub.s32 256, 256
      %26 = vsyncadd [#allocation6], %s25
      %s27 = sshll.u32 [#allocation5], 4
      %s28 = int_to_ptr.vmem [resolvable:$true] %s27
      %33 = dma.hbm_to_vmem [thread:$0]  %s1, 256, %s28, [#allocation6], 128, 128, 8
    $region9: #{vae_forward.1} parent=1 // pred_fallthru
      _
    // Predicated region
    $region10: #{vae_forward.1} parent=1 // pred_check
      _
    $region11: #{vae_forward.1} parent=1 // pred_check_branch
      %35 = sbr.rel (0) target = $region13
    $region12: #{vae_forward.1} parent=1 // pred_region
      %s37 = ssub.s32 1536, 1536
      %38 = vsyncadd [#allocation6], %s37
      %s39 = sshll.u32 [#allocation7], 4
      %s40 = int_to_ptr.vmem [resolvable:$true] %s39
      %45 = dma.hbm_to_vmem [thread:$0]  %s2, 1536, %s40, [#allocation6], 64, 64, 4
    $region13: #{vae_forward.1} parent=1 // pred_fallthru
      _
    // Predicated region
    $region14: #{vae_forward.1} parent=1 // pred_check
      _
    $region15: #{vae_forward.1} parent=1 // pred_check_branch
      %47 = sbr.rel (0) target = $region17
    $region16: #{vae_forward.1} parent=1 // pred_region
      _
    $region17: #{vae_forward.1} parent=1 // pred_fallthru
      _
    // Predicated region
    $region18: #{vae_forward.1} parent=1 // pred_check
      _
    $region19: #{vae_forward.1} parent=1 // pred_check_branch
      %49 = sbr.rel (0) target = $region21
    $region20: #{vae_forward.1} parent=1 // pred_region
      %50 = dma.done [#allocation3], 128
    $region21: #{vae_forward.1} parent=1 // pred_fallthru
      _
    // Predicated region
    $region22: #{vae_forward.1} parent=1 // pred_check
      _
    $region23: #{vae_forward.1} parent=1 // pred_check_branch
      %52 = sbr.rel (0) target = $region25
    $region24: #{vae_forward.1} parent=1 // pred_region
      %53 = dma.done [#allocation6], 256
    $region25: #{vae_forward.1} parent=1 // pred_fallthru
      _
    // Predicated region
    $region26: #{vae_forward.1} parent=1 // pred_check
      _
    $region27: #{vae_forward.1} parent=1 // pred_check_branch
      %55 = sbr.rel (0) target = $region29
    $region28: #{vae_forward.1} parent=1 // pred_region
      %56 = dma.done [#allocation6], 1536
    $region29: #{vae_forward.1} parent=1 // pred_fallthru
      _
    %v58 = vld [vmem:[#allocation2] sm:$0xff]
    %v59 = vpack.c.bf16 %v58, %v58
    %v60 = vld [vmem:[#allocation5] sm:$0xff]
    %v61 = vld [vmem:[#allocation5 + $0x8] sm:$0xff]
    %v62 = vld [vmem:[%s3] sm:$0x3f]
    %v63 = vld [vmem:[#allocation7] sm:$0xf]
    %v64 = vld [vmem:[#allocation7 + $0x4] sm:$0xf]
    %v65 = vld [vmem:[#allocation7 + $0x8] sm:$0xf]
    %v66 = vld [vmem:[#allocation7 + $0xc] sm:$0xf]
    %s67 = scalar_lea.vmem [#allocation7], 16
    %v68 = vld [vmem:[%s67] sm:$0xf]
    %v69 = vld [vmem:[%s67 + $0x4] sm:$0xf]
    %v70 = vld [vmem:[%s67 + $0x8] sm:$0xf]
    %v71 = vld [vmem:[%s67 + $0xc] sm:$0xf]
    %s72 = scalar_lea.vmem [#allocation7], 32
    %v73 = vld [vmem:[%s72] sm:$0xf]
    %v74 = vld [vmem:[%s72 + $0x4] sm:$0xf]
    %v75 = vld [vmem:[%s72 + $0x8] sm:$0xf]
    %v76 = vld [vmem:[%s72 + $0xc] sm:$0xf]
    %s77 = scalar_lea.vmem [#allocation7], 48
    %v78 = vld [vmem:[%s77] sm:$0xf]
    %v79 = vld [vmem:[%s77 + $0x4] sm:$0xf]
    %s80 = scalar_lea.vmem [#allocation7], 64
    %v81 = vld [vmem:[%s80] sm:$0xf]
    %v82 = vld [vmem:[%s80 + $0x4] sm:$0xf]
    %v83 = vld [vmem:[%s80 + $0x8] sm:$0xf]
    %v84 = vld [vmem:[%s80 + $0xc] sm:$0xf]
    %s85 = scalar_lea.vmem [#allocation7], 80
    %v86 = vld [vmem:[%s85] sm:$0xf]
    %v87 = vld [vmem:[%s85 + $0x4] sm:$0xf]
    %v88 = vld [vmem:[%s85 + $0x8] sm:$0xf]
    %v89 = vld [vmem:[%s85 + $0xc] sm:$0xf]
    %v90 = vlaneseq
    %v91 = vshrl.u32 %v90, 7
    %v92 = vsub.s32 0, %v91
    %v93 = vrot.slane %v62, %v92
    %v98 = vunpack.c.l.b16 %v63
    %v99 = vunpack.c.l.b16 %v64
    %v100 = vunpack.c.l.b16 %v65
    %v101 = vunpack.c.l.b16 %v66
    %v102 = vpack.c.b16 %v99, %v98
    %v103 = vpack.c.b16 %v101, %v100
    %vm106 = vcmask 261120
    %v108 = vsel %vm106, %v59, 0
    %110 = vmatprep.subr.bf16.mxu0 0
    %111 = vmatpush1.bf16.msra.mxu0 %v102
    %112 = vmatprep.subr.bf16.mxu0 0
    %113 = vmatpush1.bf16.msra.mxu0 %v103
    %114 = vmatprep.subr.bf16.mxu0 0
    %115 = vmatpush1.bf16.msra.mxu0 0
    %116 = vmatprep.subr.bf16.mxu0 0
    %117 = vmatpush1.bf16.msra.mxu0 0
    %118 = vmatprep.subr.bf16.mxu0 0
    %119 = vmatpush1.bf16.msra.mxu0 0
    %120 = vmatprep.subr.bf16.mxu0 0
    %121 = vmatpush1.bf16.msra.mxu0 0
    %122 = vmatprep.subr.bf16.mxu0 0
    %123 = vmatpush1.bf16.msra.mxu0 0
    %124 = vmatprep.subr.bf16.mxu0 0
    %125 = vmatpush1.bf16.msra.mxu0 0
    %126 = vmatprep.subr.bf16.mxu0 0
    %127 = vmatpush1.bf16.msra.mxu0 0
    %128 = vmatprep.subr.bf16.mxu0 0
    %129 = vmatpush1.bf16.msra.mxu0 0
    %130 = vmatprep.subr.bf16.mxu0 0
    %131 = vmatpush1.bf16.msra.mxu0 0
    %132 = vmatprep.subr.bf16.mxu0 0
    %133 = vmatpush1.bf16.msra.mxu0 0
    %134 = vmatprep.subr.bf16.mxu0 0
    %135 = vmatpush1.bf16.msra.mxu0 0
    %136 = vmatprep.subr.bf16.mxu0 0
    %137 = vmatpush1.bf16.msra.mxu0 0
    %138 = vmatprep.subr.bf16.mxu0 0
    %139 = vmatpush1.bf16.msra.mxu0 0
    %140 = vmatprep.subr.bf16.mxu0 0
    %141 = vmatpush1.bf16.msra.mxu0 0
    %142 = vmatprep.mubr.bf16.mxu0 0
    %143 = vmatmul.mubr.bf16.gmra.mrb[0].mxu0 %v108
    %v144 = vpop.f32.mrb[0].mxu0
    %v145 = vadd.f32 %v93, %v144
    %v146 = vpop.f32.mrb[0].mxu0
    %v147 = vpop.f32.mrb[0].mxu0
    %v148 = vpop.f32.mrb[0].mxu0
    %149 = vdwg.mxu0
    %v150 = vmax.f32 %v145, 0.0
    %v151 = vpack.c.bf16 %v150, %v150
    %v152 = vlaneseq
    %v153 = vshrl.u32 %v152, 7
    %v154 = vsub.s32 1, %v153
    %v155 = vrot.slane %v62, %v154
    %v160 = vunpack.c.l.b16 %v68
    %v161 = vunpack.c.l.b16 %v69
    %v162 = vunpack.c.l.b16 %v70
    %v163 = vunpack.c.l.b16 %v71
    %v164 = vpack.c.b16 %v161, %v160
    %v165 = vpack.c.b16 %v163, %v162
    %v169 = vsel %vm106, %v151, 0
    %171 = vmatprep.subr.bf16.mxu0 0
    %172 = vmatpush1.bf16.msra.mxu0 %v164
    %173 = vmatprep.subr.bf16.mxu0 0
    %174 = vmatpush1.bf16.msra.mxu0 %v165
    %175 = vmatprep.subr.bf16.mxu0 0
    %176 = vmatpush1.bf16.msra.mxu0 0
    %177 = vmatprep.subr.bf16.mxu0 0
    %178 = vmatpush1.bf16.msra.mxu0 0
    %179 = vmatprep.subr.bf16.mxu0 0
    %180 = vmatpush1.bf16.msra.mxu0 0
    %181 = vmatprep.subr.bf16.mxu0 0
    %182 = vmatpush1.bf16.msra.mxu0 0
    %183 = vmatprep.subr.bf16.mxu0 0
    %184 = vmatpush1.bf16.msra.mxu0 0
    %185 = vmatprep.subr.bf16.mxu0 0
    %186 = vmatpush1.bf16.msra.mxu0 0
    %187 = vmatprep.subr.bf16.mxu0 0
    %188 = vmatpush1.bf16.msra.mxu0 0
    %189 = vmatprep.subr.bf16.mxu0 0
    %190 = vmatpush1.bf16.msra.mxu0 0
    %191 = vmatprep.subr.bf16.mxu0 0
    %192 = vmatpush1.bf16.msra.mxu0 0
    %193 = vmatprep.subr.bf16.mxu0 0
    %194 = vmatpush1.bf16.msra.mxu0 0
    %195 = vmatprep.subr.bf16.mxu0 0
    %196 = vmatpush1.bf16.msra.mxu0 0
    %197 = vmatprep.subr.bf16.mxu0 0
    %198 = vmatpush1.bf16.msra.mxu0 0
    %199 = vmatprep.subr.bf16.mxu0 0
    %200 = vmatpush1.bf16.msra.mxu0 0
    %201 = vmatprep.subr.bf16.mxu0 0
    %202 = vmatpush1.bf16.msra.mxu0 0
    %203 = vmatprep.mubr.bf16.mxu0 0
    %204 = vmatmul.mubr.bf16.gmra.mrb[0].mxu0 %v169
    %v205 = vpop.f32.mrb[0].mxu0
    %v206 = vadd.f32 %v155, %v205
    %v207 = vpop.f32.mrb[0].mxu0
    %v208 = vpop.f32.mrb[0].mxu0
    %v209 = vpop.f32.mrb[0].mxu0
    %210 = vdwg.mxu0
    %v211 = vmax.f32 %v206, 0.0
    %v212 = vpack.c.bf16 %v211, %v211
    %v213 = vlaneseq
    %v214 = vshrl.u32 %v213, 7
    %v215 = vsub.s32 2, %v214
    %v216 = vrot.slane %v62, %v215
    %v221 = vunpack.c.l.b16 %v73
    %v222 = vunpack.c.l.b16 %v74
    %v223 = vunpack.c.l.b16 %v75
    %v224 = vunpack.c.l.b16 %v76
    %v225 = vpack.c.b16 %v222, %v221
    %v226 = vpack.c.b16 %v224, %v223
    %v230 = vsel %vm106, %v212, 0
    %232 = vmatprep.subr.bf16.mxu0 0
    %233 = vmatpush1.bf16.msra.mxu0 %v225
    %234 = vmatprep.subr.bf16.mxu0 0
    %235 = vmatpush1.bf16.msra.mxu0 %v226
    %236 = vmatprep.subr.bf16.mxu0 0
    %237 = vmatpush1.bf16.msra.mxu0 0
    %238 = vmatprep.subr.bf16.mxu0 0
    %239 = vmatpush1.bf16.msra.mxu0 0
    %240 = vmatprep.subr.bf16.mxu0 0
    %241 = vmatpush1.bf16.msra.mxu0 0
    %242 = vmatprep.subr.bf16.mxu0 0
    %243 = vmatpush1.bf16.msra.mxu0 0
    %244 = vmatprep.subr.bf16.mxu0 0
    %245 = vmatpush1.bf16.msra.mxu0 0
    %246 = vmatprep.subr.bf16.mxu0 0
    %247 = vmatpush1.bf16.msra.mxu0 0
    %248 = vmatprep.subr.bf16.mxu0 0
    %249 = vmatpush1.bf16.msra.mxu0 0
    %250 = vmatprep.subr.bf16.mxu0 0
    %251 = vmatpush1.bf16.msra.mxu0 0
    %252 = vmatprep.subr.bf16.mxu0 0
    %253 = vmatpush1.bf16.msra.mxu0 0
    %254 = vmatprep.subr.bf16.mxu0 0
    %255 = vmatpush1.bf16.msra.mxu0 0
    %256 = vmatprep.subr.bf16.mxu0 0
    %257 = vmatpush1.bf16.msra.mxu0 0
    %258 = vmatprep.subr.bf16.mxu0 0
    %259 = vmatpush1.bf16.msra.mxu0 0
    %260 = vmatprep.subr.bf16.mxu0 0
    %261 = vmatpush1.bf16.msra.mxu0 0
    %262 = vmatprep.subr.bf16.mxu0 0
    %263 = vmatpush1.bf16.msra.mxu0 0
    %264 = vmatprep.mubr.bf16.mxu0 0
    %265 = vmatmul.mubr.bf16.gmra.mrb[0].mxu0 %v230
    %v266 = vpop.f32.mrb[0].mxu0
    %v267 = vadd.f32 %v216, %v266
    %v268 = vpop.f32.mrb[0].mxu0
    %v269 = vpop.f32.mrb[0].mxu0
    %v270 = vpop.f32.mrb[0].mxu0
    %271 = vdwg.mxu0
    %vm272 = vcmp.gt.f32.partialorder %v267, 20.0
    %v273 = vmin.f32 %v267, 20.0
    %v274 = vmul.f32 %v273, 1.442695
    %v275 = vpow.pop %v274
    %v276 = vadd.f32 %v275, 1.0
    %v277 = vlog2.pop %v276
    %v278 = vmul.f32 %v277, 0.6931472
    %v279 = vmul.f32 -0.5, %v275
    %v280 = vadd.f32 %v279, 1.0
    %v281 = vmul.f32 %v280, %v275
    %v282 = vand.u32 2147483647, %v275
    %vm283 = vcmp.lt.f32.partialorder %v282, 0.0004427343
    %v284 = vsel %vm283, %v281, %v278
    %v285 = vsel %vm272, %v267, %v284
    %v286 = vrsqrt.pop %v285
    %v287 = vmul.f32 %v285, %v286
    %vm288 = vcmp.eq.f32.partialorder %v285, inf
    %v289 = vsel %vm288, %v285, %v287
    %vm290 = vcmp.eq.f32.partialorder %v285, 0.0
    %v291 = vand.u32 %v285, 2147483648
    %v292 = vsel %vm290, %v291, %v289
    %295 = vrot.lane.b32.xlu0 %v60, 16
    %v296 = vpop.permute.xlu0 %295
    %297 = vrot.lane.b32.xlu0 %v61, 16
    %v298 = vpop.permute.xlu0 %297
    %v301 = vmul.f32 %v292, %v296
    %v302 = vmul.f32 %v292, %v298
    %305 = vrot.lane.b32.xlu0 %v301, 112
    %v306 = vpop.permute.xlu0 %305
    %307 = vrot.lane.b32.xlu0 %v302, 112
    %v308 = vpop.permute.xlu0 %307
    %v311 = vadd.f32 %v267, %v306
    %v312 = vadd.f32 %v267, %v308
    %v313 = vpack.c.bf16 %v312, %v311
    %v314 = vlaneseq
    %v315 = vshrl.u32 %v314, 7
    %v316 = vsub.s32 3, %v315
    %v317 = vrot.slane %v62, %v316
    %v320 = vunpack.c.l.b16 %v78
    %v321 = vunpack.c.l.b16 %v79
    %v322 = vpack.c.b16 %v321, %v320
    %vm324 = vcmask 130048
    %v326 = vsel %vm324, %v313, 0
    %328 = vmatprep.subr.bf16.mxu0 0
    %329 = vmatpush1.bf16.msra.mxu0 %v322
    %330 = vmatprep.subr.bf16.mxu0 0
    %331 = vmatpush1.bf16.msra.mxu0 0
    %332 = vmatprep.subr.bf16.mxu0 0
    %333 = vmatpush1.bf16.msra.mxu0 0
    %334 = vmatprep.subr.bf16.mxu0 0
    %335 = vmatpush1.bf16.msra.mxu0 0
    %336 = vmatprep.subr.bf16.mxu0 0
    %337 = vmatpush1.bf16.msra.mxu0 0
    %338 = vmatprep.subr.bf16.mxu0 0
    %339 = vmatpush1.bf16.msra.mxu0 0
    %340 = vmatprep.subr.bf16.mxu0 0
    %341 = vmatpush1.bf16.msra.mxu0 0
    %342 = vmatprep.subr.bf16.mxu0 0
    %343 = vmatpush1.bf16.msra.mxu0 0
    %344 = vmatprep.subr.bf16.mxu0 0
    %345 = vmatpush1.bf16.msra.mxu0 0
    %346 = vmatprep.subr.bf16.mxu0 0
    %347 = vmatpush1.bf16.msra.mxu0 0
    %348 = vmatprep.subr.bf16.mxu0 0
    %349 = vmatpush1.bf16.msra.mxu0 0
    %350 = vmatprep.subr.bf16.mxu0 0
    %351 = vmatpush1.bf16.msra.mxu0 0
    %352 = vmatprep.subr.bf16.mxu0 0
    %353 = vmatpush1.bf16.msra.mxu0 0
    %354 = vmatprep.subr.bf16.mxu0 0
    %355 = vmatpush1.bf16.msra.mxu0 0
    %356 = vmatprep.subr.bf16.mxu0 0
    %357 = vmatpush1.bf16.msra.mxu0 0
    %358 = vmatprep.subr.bf16.mxu0 0
    %359 = vmatpush1.bf16.msra.mxu0 0
    %360 = vmatprep.mubr.bf16.mxu0 0
    %361 = vmatmul.mubr.bf16.gmra.mrb[0].mxu0 %v326
    %v362 = vpop.f32.mrb[0].mxu0
    %v363 = vadd.f32 %v317, %v362
    %v364 = vpop.f32.mrb[0].mxu0
    %v365 = vpop.f32.mrb[0].mxu0
    %v366 = vadd.f32 %v317, %v365
    %v367 = vpop.f32.mrb[0].mxu0
    %368 = vdwg.mxu0
    %v369 = vmax.f32 %v363, 0.0
    %v370 = vmax.f32 %v366, 0.0
    %v371 = vpack.c.bf16 %v370, %v369
    %v372 = vlaneseq
    %v373 = vshrl.u32 %v372, 7
    %v374 = vsub.s32 4, %v373
    %v375 = vrot.slane %v62, %v374
    %v380 = vunpack.c.l.b16 %v81
    %v381 = vunpack.c.l.b16 %v82
    %v382 = vunpack.c.l.b16 %v83
    %v383 = vunpack.c.l.b16 %v84
    %v384 = vpack.c.b16 %v381, %v380
    %v385 = vpack.c.b16 %v383, %v382
    %v389 = vsel %vm106, %v371, 0
    %391 = vmatprep.subr.bf16.mxu0 0
    %392 = vmatpush1.bf16.msra.mxu0 %v384
    %393 = vmatprep.subr.bf16.mxu0 0
    %394 = vmatpush1.bf16.msra.mxu0 %v385
    %395 = vmatprep.subr.bf16.mxu0 0
    %396 = vmatpush1.bf16.msra.mxu0 0
    %397 = vmatprep.subr.bf16.mxu0 0
    %398 = vmatpush1.bf16.msra.mxu0 0
    %399 = vmatprep.subr.bf16.mxu0 0
    %400 = vmatpush1.bf16.msra.mxu0 0
    %401 = vmatprep.subr.bf16.mxu0 0
    %402 = vmatpush1.bf16.msra.mxu0 0
    %403 = vmatprep.subr.bf16.mxu0 0
    %404 = vmatpush1.bf16.msra.mxu0 0
    %405 = vmatprep.subr.bf16.mxu0 0
    %406 = vmatpush1.bf16.msra.mxu0 0
    %407 = vmatprep.subr.bf16.mxu0 0
    %408 = vmatpush1.bf16.msra.mxu0 0
    %409 = vmatprep.subr.bf16.mxu0 0
    %410 = vmatpush1.bf16.msra.mxu0 0
    %411 = vmatprep.subr.bf16.mxu0 0
    %412 = vmatpush1.bf16.msra.mxu0 0
    %413 = vmatprep.subr.bf16.mxu0 0
    %414 = vmatpush1.bf16.msra.mxu0 0
    %415 = vmatprep.subr.bf16.mxu0 0
    %416 = vmatpush1.bf16.msra.mxu0 0
    %417 = vmatprep.subr.bf16.mxu0 0
    %418 = vmatpush1.bf16.msra.mxu0 0
    %419 = vmatprep.subr.bf16.mxu0 0
    %420 = vmatpush1.bf16.msra.mxu0 0
    %421 = vmatprep.subr.bf16.mxu0 0
    %422 = vmatpush1.bf16.msra.mxu0 0
    %423 = vmatprep.mubr.bf16.mxu0 0
    %424 = vmatmul.mubr.bf16.gmra.mrb[0].mxu0 %v389
    %v425 = vpop.f32.mrb[0].mxu0
    %v426 = vadd.f32 %v375, %v425
    %v427 = vpop.f32.mrb[0].mxu0
    %v428 = vpop.f32.mrb[0].mxu0
    %v429 = vadd.f32 %v375, %v428
    %v430 = vpop.f32.mrb[0].mxu0
    %431 = vdwg.mxu0
    %v432 = vmax.f32 %v426, 0.0
    %v433 = vmax.f32 %v429, 0.0
    %v434 = vpack.c.bf16 %v433, %v432
    %v435 = vlaneseq
    %v436 = vshrl.u32 %v435, 7
    %v437 = vsub.s32 5, %v436
    %v438 = vrot.slane %v62, %v437
    %v443 = vunpack.c.l.b16 %v86
    %v444 = vunpack.c.l.b16 %v87
    %v445 = vunpack.c.l.b16 %v88
    %v446 = vunpack.c.l.b16 %v89
    %v447 = vpack.c.b16 %v444, %v443
    %v448 = vpack.c.b16 %v446, %v445
    %v452 = vsel %vm106, %v434, 0
    %454 = vmatprep.subr.bf16.mxu0 0
    %455 = vmatpush1.bf16.msra.mxu0 %v447
    %456 = vmatprep.subr.bf16.mxu0 0
    %457 = vmatpush1.bf16.msra.mxu0 %v448
    %458 = vmatprep.subr.bf16.mxu0 0
    %459 = vmatpush1.bf16.msra.mxu0 0
    %460 = vmatprep.subr.bf16.mxu0 0
    %461 = vmatpush1.bf16.msra.mxu0 0
    %462 = vmatprep.subr.bf16.mxu0 0
    %463 = vmatpush1.bf16.msra.mxu0 0
    %464 = vmatprep.subr.bf16.mxu0 0
    %465 = vmatpush1.bf16.msra.mxu0 0
    %466 = vmatprep.subr.bf16.mxu0 0
    %467 = vmatpush1.bf16.msra.mxu0 0
    %468 = vmatprep.subr.bf16.mxu0 0
    %469 = vmatpush1.bf16.msra.mxu0 0
    %470 = vmatprep.subr.bf16.mxu0 0
    %471 = vmatpush1.bf16.msra.mxu0 0
    %472 = vmatprep.subr.bf16.mxu0 0
    %473 = vmatpush1.bf16.msra.mxu0 0
    %474 = vmatprep.subr.bf16.mxu0 0
    %475 = vmatpush1.bf16.msra.mxu0 0
    %476 = vmatprep.subr.bf16.mxu0 0
    %477 = vmatpush1.bf16.msra.mxu0 0
    %478 = vmatprep.subr.bf16.mxu0 0
    %479 = vmatpush1.bf16.msra.mxu0 0
    %480 = vmatprep.subr.bf16.mxu0 0
    %481 = vmatpush1.bf16.msra.mxu0 0
    %482 = vmatprep.subr.bf16.mxu0 0
    %483 = vmatpush1.bf16.msra.mxu0 0
    %484 = vmatprep.subr.bf16.mxu0 0
    %485 = vmatpush1.bf16.msra.mxu0 0
    %486 = vmatprep.mubr.bf16.mxu0 0
    %487 = vmatmul.mubr.bf16.gmra.mrb[0].mxu0 %v452
    %v488 = vpop.f32.mrb[0].mxu0
    %v489 = vadd.f32 %v438, %v488
    %v490 = vpop.f32.mrb[0].mxu0
    %v491 = vpop.f32.mrb[0].mxu0
    %v492 = vadd.f32 %v438, %v491
    %v493 = vpop.f32.mrb[0].mxu0
    %494 = vdwg.mxu0
    %v495 = vmul.f32 %v489, 0.5
    %v496 = vmul.f32 %v492, 0.5
    %v497 = vtanh.pop %v495
    %v498 = vtanh.pop %v496
    %v499 = vadd.f32 %v497, 1.0
    %v500 = vadd.f32 %v498, 1.0
    %v501 = vmul.f32 %v499, 0.5
    %v502 = vmul.f32 %v500, 0.5
    %503 = vst.msk [vmem:[#allocation8] sm:$0xff] %vm106, %v501
    %504 = vst.msk [vmem:[#allocation8 + $0x8] sm:$0xff] %vm106, %v502
    // Predicated region
    $region30: #{vae_forward.1} parent=1 // pred_check
      _
    $region31: #{vae_forward.1} parent=1 // pred_check_branch
      %506 = sbr.rel (0) target = $region33
    $region32: #{vae_forward.1} parent=1 // pred_region
      %s508 = ssub.s32 256, 256
      %509 = vsyncadd [#allocation4], %s508
      %s510 = sshll.u32 [#allocation8], 4
      %s511 = int_to_ptr.vmem [resolvable:$true] %s510
      %516 = dma.vmem_to_hbm [thread:$0]  %s511, 256, %s4, [#allocation4], 128, 128, 8
    $region33: #{vae_forward.1} parent=1 // pred_fallthru
      _
    // Predicated region
    $region34: #{vae_forward.1} parent=1 // pred_check
      _
    $region35: #{vae_forward.1} parent=1 // pred_check_branch
      %518 = sbr.rel (0) target = $region37
    $region36: #{vae_forward.1} parent=1 // pred_region
      %519 = dma.done [#allocation4], 256
    $region37: #{vae_forward.1} parent=1 // pred_fallthru
      _
    %520 = vsyncpa [#allocation3], 1
    %521 = vsyncpa [#allocation6], 1
    %522 = vsyncpa [#allocation4], 1

</llo_original>
